<compile_context>
chip_gen: v6e
topology: v6e:2x2x1
jax: 0.10.0
libtpu: 0.0.40
codegen_flags: <defaults>
</compile_context>

<pallas_src>
import functools

import jax
import jax.numpy as jnp
import numpy as np
from jax.experimental import pallas as pl
from jax.experimental.pallas import tpu as pltpu

_GATED = ("glu", "gtu")
_ACTS = ("glu", "gtu", "relu", "leaky_relu", "silu")


# --------------------------------------------------------------------------- #
# Hardware-aware policy helpers
# --------------------------------------------------------------------------- #
def _tpu_info():
    """Best-effort (physical VMEM bytes, #TensorCores/chip, default scoped VMEM)."""
    kind = ""
    try:
        kind = jax.devices()[0].device_kind.lower()
    except Exception:
        pass
    if "v7" in kind:
        vmem_phys, n_tc, scoped_default = 64 << 20, 2, 32 << 20
    elif "v5 lite" in kind or "v5e" in kind or "v5litepod" in kind:
        vmem_phys, n_tc, scoped_default = 128 << 20, 1, 16 << 20
    else:  # v6e / v5p / v4 / unknown: conservative defaults
        vmem_phys, n_tc, scoped_default = 128 << 20, 1, 32 << 20
    try:  # refine with the real number when the query is available
        vmem_phys = int(pltpu.get_tpu_info().vmem_capacity_bytes)
    except Exception:
        pass
    return vmem_phys, n_tc, scoped_default


def _choose_bt(B, per_batch_bytes, n_tc, vmem_budget):
    """Largest batches-per-block fitting the VMEM budget; on multi-TC chips keep
    >= 2 (preferably an even number of) parallel grid steps so both cores work."""
    divisors = [d for d in range(1, B + 1) if B % d == 0]
    fitting = [d for d in divisors if d * per_batch_bytes <= vmem_budget] or [1]
    if n_tc >= 2 and B >= 2:
        even = [d for d in fitting if (B // d) >= 2 and (B // d) % 2 == 0]
        if even:
            return even[-1]
        two = [d for d in fitting if (B // d) >= 2]
        if two:
            return two[-1]
    return fitting[-1]


# --------------------------------------------------------------------------- #
# Kernels
# --------------------------------------------------------------------------- #
def _activate(y, c_out, act_func, channels_first):
    """Gated / plain activation on a 2-D f32 tile (channel axis 0 or 1)."""
    if act_func in _GATED:
        if channels_first:
            p, q = y[:c_out, :], y[c_out:, :]
        else:
            p, q = y[:, :c_out], y[:, c_out:]
        if act_func == "glu":
            return p * jax.nn.sigmoid(q)
        return jnp.tanh(p) * jax.nn.sigmoid(q)          # gtu
    if act_func == "relu":
        return jnp.maximum(y, 0.0)
    if act_func == "leaky_relu":
        return jnp.where(y >= 0.0, y, 0.01 * y)
    if act_func == "silu":
        return y * jax.nn.sigmoid(y)
    raise NotImplementedError(act_func)


def _make_kernel_channels_last(Kt, c_in, c_out, T, V, Bt, act_func):
    """Small co2: rows = (b, t, v), columns = channels."""
    T_out = T - Kt + 1
    ToV = T_out * V
    co2 = 2 * c_out if act_func in _GATED else c_out
    M = Bt * ToV
    fuse_taps = Kt * c_in >= 128      # lane-concat only pays off for a wide K

    def kernel(x_ref, w_ref, b_ref, o_ref):
        # x_ref: (Bt, c_in, T*V) in the input dtype (no f32 upcast of the block).
        x_cl = jnp.swapaxes(x_ref[...], 1, 2)                 # (Bt, T*V, c_in)
        bias = b_ref[...].astype(jnp.float32)                 # (1, co2)
        if fuse_taps:
            taps = [x_cl[:, kt * V:kt * V + ToV, :].reshape(M, c_in)
                    for kt in range(Kt)]
            xs = jnp.concatenate(taps, axis=-1)                # (M, Kt*c_in)
            y = jnp.dot(xs, w_ref[...], preferred_element_type=jnp.float32)
        else:
            # Kt*c_in << 128: the masked lane-concat costs more than it saves;
            # accumulate Kt small dots into an f32 tile instead.
            y = jnp.zeros((M, co2), jnp.float32)
            for kt in range(Kt):
                tap = x_cl[:, kt * V:kt * V + ToV, :].reshape(M, c_in)
                y = y + jnp.dot(tap, w_ref[kt * c_in:(kt + 1) * c_in, :],
                                preferred_element_type=jnp.float32)
        y = y + bias                                           # fused conv+align bias
        out = _activate(y, c_out, act_func, channels_first=False)
        out = out.astype(o_ref.dtype)                          # cast BEFORE relayout
        # Back to NCHW per batch (single minor transpose), 3-D store (no flatten).
        o_ref[...] = jnp.swapaxes(out.reshape(Bt, ToV, c_out), 1, 2)

    return kernel


def _make_kernel_channels_first(Kt, c_in, c_out, T, V, Bt, act_func):
    """co2 >= 128: (co2, Kt*c_in) @ (Kt*c_in, T_out*V) per batch, NCHW out directly."""
    T_out = T - Kt + 1
    ToV = T_out * V

    def kernel(x_ref, w_ref, b_ref, o_ref):
        x = x_ref[...]                                         # (Bt, c_in, T*V)
        # Taps stack along sublanes (cheap) -> (Bt, Kt*c_in, T_out*V); no transpose.
        xs = jnp.concatenate(
            [x[:, :, kt * V:kt * V + ToV] for kt in range(Kt)], axis=1)
        w = w_ref[...]                                         # (co2, Kt*c_in)
        bias = b_ref[...].astype(jnp.float32)                  # (co2, 1)
        for b in range(Bt):                                    # Bt is small by policy
            y = jnp.dot(w, xs[b], preferred_element_type=jnp.float32) + bias
            out = _activate(y, c_out, act_func, channels_first=True)
            o_ref[b, :, :] = out.astype(o_ref.dtype)           # already channels-first

    return kernel


# --------------------------------------------------------------------------- #
# Wrapper
# --------------------------------------------------------------------------- #
def temporal_conv_layer(x_nchw, w_causal, b_causal, w_align, b_align,
                        Kt, c_in, c_out, act_func="glu"):
    """x_nchw: (B, c_in, T, V) like the PyTorch module. Returns (B, c_out, T_out, V)."""
    if act_func not in _ACTS:
        raise NotImplementedError(act_func)
    B, C, T, V = x_nchw.shape
    assert C == c_in
    T_out = T - Kt + 1
    TV, ToV = T * V, T_out * V
    co2 = 2 * c_out if act_func in _GATED else c_out
    dtype = x_nchw.dtype
    itemsize = jnp.dtype(dtype).itemsize

    # ---- Algebraic fold of the Align branch (1x1 conv / zero-pad / identity):
    #      x_p + align(x) == xs @ (W_P + pad(W_align)) + (b_P + b_align)
    w_f = jnp.asarray(w_causal, jnp.float32).reshape(Kt * c_in, co2)
    w_f = w_f.at[(Kt - 1) * c_in:, :c_out].add(jnp.asarray(w_align, jnp.float32))
    b_f = jnp.asarray(b_causal, jnp.float32).reshape(co2)
    b_f = b_f.at[:c_out].add(jnp.asarray(b_align, jnp.float32).reshape(c_out))

    channels_first = (co2 >= 128) and (c_out % 8 == 0)
    if channels_first:
        w_arg = jnp.transpose(w_f).astype(dtype)       # (co2, Kt*c_in)
        b_arg = b_f.reshape(co2, 1)
    else:
        w_arg = w_f.astype(dtype)                      # (Kt*c_in, co2)
        b_arg = b_f.reshape(1, co2)
    # TODO(synk): when c_out % 128 != 0 and co2 <= 256, pad the P/Q column groups
    # to 128-lane boundaries so the gating slices are vreg-aligned (v6e/v7x).

    # ---- generation-aware block size / VMEM policy -----------------------------
    vmem_phys, n_tc, scoped_default = _tpu_info()
    fixed = 2 * (Kt * c_in * co2 * itemsize + co2 * 4) + (2 << 20)
    per_batch = (itemsize * (2 * c_in * TV + 2 * c_out * ToV      # dbl-buffered I/O
                             + c_in * TV + Kt * c_in * ToV)       # relayout / im2col copies
                 + 4 * ToV * (co2 + 2 * c_out))                   # f32 y + act temps
    if n_tc >= 2:          # v7x: 64 MiB physical per TC -> leave real headroom
        budget = min(40 << 20, (vmem_phys * 5) // 8)
        limit_cap = min(48 << 20, (vmem_phys * 3) // 4)
    else:                  # v5e/v6e: 1 TC, 128 MiB -> maximize the DMA block
        budget = min(96 << 20, (vmem_phys * 3) // 4)
        limit_cap = (vmem_phys * 3) // 4
    Bt = _choose_bt(B, per_batch, n_tc, budget - fixed)
    grid = (B // Bt,)
    # TODO(synk): on 2-TC chips with B < 2, add a second parallel grid axis over
    # T_out row-chunks (needs a Kt-1 halo in the input index_map) for core balance.

    vmem_est = fixed + Bt * per_batch
    cp_kwargs = dict(dimension_semantics=("parallel",))
    if vmem_est > scoped_default:
        cp_kwargs["vmem_limit_bytes"] = int(min(vmem_est * 5 // 4, limit_cap))

    make = _make_kernel_channels_first if channels_first else _make_kernel_channels_last
    kernel = make(Kt, c_in, c_out, T, V, Bt, act_func)

    # ---- cost estimate for XLA scheduling --------------------------------------
    n_out = B * ToV * c_out
    flops = 2 * B * ToV * Kt * c_in * co2
    transc = {"glu": 1, "gtu": 2, "silu": 1}.get(act_func, 0) * n_out
    bytes_accessed = (B * c_in * TV * itemsize + Kt * c_in * co2 * itemsize
                      + co2 * 4 + n_out * itemsize)

    out3 = pl.pallas_call(
        kernel,
        out_shape=jax.ShapeDtypeStruct((B, c_out, ToV), dtype),
        grid=grid,
        in_specs=[
            pl.BlockSpec((Bt, c_in, TV), lambda b: (b, 0, 0)),
            pl.BlockSpec(w_arg.shape, lambda b: (0, 0)),
            pl.BlockSpec(b_arg.shape, lambda b: (0, 0)),
        ],
        out_specs=pl.BlockSpec((Bt, c_out, ToV), lambda b: (b, 0, 0)),
        compiler_params=pltpu.CompilerParams(**cp_kwargs),
        cost_estimate=pl.CostEstimate(flops=int(flops),
                                      transcendentals=int(transc),
                                      bytes_accessed=int(bytes_accessed)),
    )(x_nchw.reshape(B, c_in, TV), w_arg, b_arg)   # (T,V)->(T*V): free HBM reshape

    return out3.reshape(B, c_out, T_out, V)        # free contiguous reshape to NCHW


# --------------------------------------------------------------------------- #
# Synthetic parameters + plain-JAX reference (mirrors the PyTorch forward)
# --------------------------------------------------------------------------- #
def init_params(key, Kt, c_in, c_out, act_func="glu", dtype=jnp.float32):
    co2 = 2 * c_out if act_func in _GATED else c_out
    k_wc, k_bc, k_wa, k_ba = jax.random.split(key, 4)

    bound_c = 1.0 / np.sqrt(c_in * Kt)
    w_causal = jax.random.uniform(k_wc, (Kt, c_in, co2), dtype,
                                  minval=-bound_c, maxval=bound_c)
    b_causal = jax.random.uniform(k_bc, (1, co2), dtype,
                                  minval=-bound_c, maxval=bound_c)

    if c_in > c_out:        # Align = 1x1 conv
        bound_a = 1.0 / np.sqrt(c_in)
        w_align = jax.random.uniform(k_wa, (c_in, c_out), dtype,
                                     minval=-bound_a, maxval=bound_a)
        b_align = jax.random.uniform(k_ba, (1, c_out), dtype,
                                     minval=-bound_a, maxval=bound_a)
    elif c_in < c_out:      # channel zero-pad == multiply by [I | 0]
        w_align = jnp.concatenate(
            [jnp.eye(c_in, dtype=dtype),
             jnp.zeros((c_in, c_out - c_in), dtype)], axis=1)
        b_align = jnp.zeros((1, c_out), dtype)
    else:                   # identity
        w_align = jnp.eye(c_in, dtype=dtype)
        b_align = jnp.zeros((1, c_out), dtype)
    return w_causal, b_causal, w_align, b_align


def reference(x_nchw, w_causal, b_causal, w_align, b_align, Kt, c_in, c_out,
              act_func="glu"):
    B, C, T, V = x_nchw.shape
    T_out = T - Kt + 1
    x_cl = jnp.transpose(x_nchw, (0, 2, 3, 1)).astype(jnp.float32)

    conv = jnp.zeros((B, T_out, V, w_causal.shape[-1]), jnp.float32)
    for kt in range(Kt):
        conv = conv + jnp.einsum("btvc,co->btvo",
                                 x_cl[:, kt:kt + T_out], w_causal[kt])
    conv = conv + b_causal[0]

    x_in = jnp.einsum("btvc,co->btvo", x_cl[:, Kt - 1:], w_align) + b_align[0]

    if act_func == "glu":
        out = (conv[..., :c_out] + x_in) * jax.nn.sigmoid(conv[..., c_out:])
    elif act_func == "gtu":
        out = jnp.tanh(conv[..., :c_out] + x_in) * jax.nn.sigmoid(conv[..., c_out:])
    elif act_func == "relu":
        out = jnp.maximum(conv + x_in, 0.0)
    elif act_func == "leaky_relu":
        s = conv + x_in
        out = jnp.where(s >= 0, s, 0.01 * s)
    elif act_func == "silu":
        s = conv + x_in
        out = s * jax.nn.sigmoid(s)
    else:
        raise NotImplementedError(act_func)
    return jnp.transpose(out, (0, 3, 1, 2)).astype(x_nchw.dtype)


def _run_case(seed, B, c_in, c_out, T, V, Kt, act_func):
    key = jax.random.PRNGKey(seed)
    k_x, k_p = jax.random.split(key)
    x = jax.random.normal(k_x, (B, c_in, T, V), jnp.float32)
    params = init_params(k_p, Kt, c_in, c_out, act_func)

    run = jax.jit(functools.partial(temporal_conv_layer,
                                    Kt=Kt, c_in=c_in, c_out=c_out,
                                    act_func=act_func))
    out = jax.block_until_ready(run(x, *params))
    ref = reference(x, *params, Kt, c_in, c_out, act_func)
    # Tolerance covers the algebraic Align fold under the MXU's bf16-pass
    # rounding of the (unfolded) reference's f32 weights.
    np.testing.assert_allclose(np.asarray(out), np.asarray(ref),
                               rtol=2e-2, atol=2e-2)
    assert out.shape == (B, c_out, T - Kt + 1, V)


if __name__ == "__main__":
    # NCHW = (batch, c_in, timestep, n_vertex)
    _run_case(0, B=2, c_in=8,  c_out=4,  T=8,  V=16, Kt=3, act_func="glu")   # CL, per-tap dots, Align=1x1 conv
    _run_case(1, B=2, c_in=4,  c_out=8,  T=8,  V=16, Kt=2, act_func="relu")  # CL, per-tap dots, Align=zero-pad
    _run_case(2, B=2, c_in=64, c_out=32, T=8,  V=16, Kt=3, act_func="relu")  # CL, fused im2col matmul
    _run_case(3, B=2, c_in=16, c_out=64, T=10, V=16, Kt=3, act_func="glu")   # CF (co2=128), no transposes
    print("KERNEL_OK")
</pallas_src>

<mosaic_0001>
module attributes {stable_mosaic.version = 11 : i64} {
  func.func @kernel(%arg0: i32, %arg1: memref<2x8x128xf32, #tpu.memory_space<vmem>>, %arg2: memref<24x8xf32, #tpu.memory_space<vmem>>, %arg3: memref<1x8xf32, #tpu.memory_space<vmem>>, %arg4: memref<2x4x96xf32, #tpu.memory_space<vmem>>) attributes {dimension_semantics = [#tpu.dimension_semantics<parallel>], iteration_bounds = array<i64: 1>, scalar_prefetch = 0 : i64, scratch_operands = 0 : i64, tpu.core_type = #tpu.core_type<tc>, window_params = [{transform_indices = @transform_0, window_bounds = array<i64: 2, 8, 128>}, {pipeline_mode = #tpu.pipeline_mode<synchronous>, transform_indices = @transform_1, window_bounds = array<i64: 24, 8>}, {pipeline_mode = #tpu.pipeline_mode<synchronous>, transform_indices = @transform_2, window_bounds = array<i64: 1, 8>}, {transform_indices = @transform_3, window_bounds = array<i64: 2, 4, 96>}]} {
    %c0 = arith.constant 0 : index
    %c0_0 = arith.constant 0 : index
    %c0_1 = arith.constant 0 : index
    %0 = vector.load %arg1[%c0, %c0_0, %c0_1] : memref<2x8x128xf32, #tpu.memory_space<vmem>>, vector<2x8x128xf32>
    %1 = tpu.transpose %0, [0, 2, 1] : vector<2x8x128xf32> -> vector<2x128x8xf32>
    %c0_2 = arith.constant 0 : index
    %c0_3 = arith.constant 0 : index
    %2 = vector.load %arg3[%c0_2, %c0_3] : memref<1x8xf32, #tpu.memory_space<vmem>>, vector<1x8xf32>
    %cst = arith.constant 0.000000e+00 : f32
    %3 = vector.broadcast %cst : f32 to vector<192x8xf32>
    %4 = vector.extract_strided_slice %1 {offsets = [0, 0, 0], sizes = [2, 96, 8], strides = [1, 1, 1]} : vector<2x128x8xf32> to vector<2x96x8xf32>
    %5 = vector.shape_cast %4 : vector<2x96x8xf32> to vector<192x8xf32>
    %c0_4 = arith.constant 0 : index
    %c0_5 = arith.constant 0 : index
    %6 = vector.load %arg2[%c0_4, %c0_5] : memref<24x8xf32, #tpu.memory_space<vmem>>, vector<8x8xf32>
    %cst_6 = arith.constant dense<0.000000e+00> : vector<192x8xf32>
    %7 = tpu.matmul %5, %6, %cst_6 {dimension_numbers = #tpu.dot_dimension_numbers<[1], [0], [0], [1], [0, 0, 1, 1], [], []>} : vector<192x8xf32>, vector<8x8xf32>, vector<192x8xf32> -> vector<192x8xf32>
    %8 = arith.addf %3, %7 : vector<192x8xf32>
    %9 = vector.extract_strided_slice %1 {offsets = [0, 16, 0], sizes = [2, 96, 8], strides = [1, 1, 1]} : vector<2x128x8xf32> to vector<2x96x8xf32>
    %10 = vector.shape_cast %9 : vector<2x96x8xf32> to vector<192x8xf32>
    %c8 = arith.constant 8 : index
    %c0_7 = arith.constant 0 : index
    %11 = vector.load %arg2[%c8, %c0_7] : memref<24x8xf32, #tpu.memory_space<vmem>>, vector<8x8xf32>
    %cst_8 = arith.constant dense<0.000000e+00> : vector<192x8xf32>
    %12 = tpu.matmul %10, %11, %cst_8 {dimension_numbers = #tpu.dot_dimension_numbers<[1], [0], [0], [1], [0, 0, 1, 1], [], []>} : vector<192x8xf32>, vector<8x8xf32>, vector<192x8xf32> -> vector<192x8xf32>
    %13 = arith.addf %8, %12 : vector<192x8xf32>
    %14 = vector.extract_strided_slice %1 {offsets = [0, 32, 0], sizes = [2, 96, 8], strides = [1, 1, 1]} : vector<2x128x8xf32> to vector<2x96x8xf32>
    %15 = vector.shape_cast %14 : vector<2x96x8xf32> to vector<192x8xf32>
    %c16 = arith.constant 16 : index
    %c0_9 = arith.constant 0 : index
    %16 = vector.load %arg2[%c16, %c0_9] : memref<24x8xf32, #tpu.memory_space<vmem>>, vector<8x8xf32>
    %cst_10 = arith.constant dense<0.000000e+00> : vector<192x8xf32>
    %17 = tpu.matmul %15, %16, %cst_10 {dimension_numbers = #tpu.dot_dimension_numbers<[1], [0], [0], [1], [0, 0, 1, 1], [], []>} : vector<192x8xf32>, vector<8x8xf32>, vector<192x8xf32> -> vector<192x8xf32>
    %18 = arith.addf %13, %17 : vector<192x8xf32>
    %19 = vector.broadcast %2 : vector<1x8xf32> to vector<192x8xf32>
    %20 = arith.addf %18, %19 : vector<192x8xf32>
    %21 = vector.extract_strided_slice %20 {offsets = [0, 0], sizes = [192, 4], strides = [1, 1]} : vector<192x8xf32> to vector<192x4xf32>
    %22 = vector.extract_strided_slice %20 {offsets = [0, 4], sizes = [192, 4], strides = [1, 1]} : vector<192x8xf32> to vector<192x4xf32>
    %23 = arith.negf %22 : vector<192x4xf32>
    %24 = math.exp %23 : vector<192x4xf32>
    %cst_11 = arith.constant 1.000000e+00 : f32
    %25 = vector.broadcast %cst_11 : f32 to vector<192x4xf32>
    %26 = arith.addf %25, %24 : vector<192x4xf32>
    %27 = arith.divf %25, %26 : vector<192x4xf32>
    %28 = arith.mulf %21, %27 : vector<192x4xf32>
    %29 = vector.shape_cast %28 : vector<192x4xf32> to vector<2x96x4xf32>
    %30 = tpu.transpose %29, [0, 2, 1] : vector<2x96x4xf32> -> vector<2x4x96xf32>
    %c0_12 = arith.constant 0 : index
    %c0_13 = arith.constant 0 : index
    %c0_14 = arith.constant 0 : index
    %31 = vector.load %arg4[%c0_12, %c0_13, %c0_14] : memref<2x4x96xf32, #tpu.memory_space<vmem>>, vector<2x4x96xf32>
    tpu.vector_store %arg4[%c0_12, %c0_13, %c0_14], %30 {strides = array<i32>} : memref<2x4x96xf32, #tpu.memory_space<vmem>>, vector<2x4x96xf32>,
    return
  }
  func.func @transform_0(%arg0: i32) -> (i32, i32, i32) {
    %c0_i32 = arith.constant 0 : i32
    %c0_i32_0 = arith.constant 0 : i32
    %c0_i32_1 = arith.constant 0 : i32
    return %arg0, %c0_i32, %c0_i32_0 : i32, i32, i32
  }
  func.func @transform_1(%arg0: i32) -> (i32, i32) {
    %c0_i32 = arith.constant 0 : i32
    %c0_i32_0 = arith.constant 0 : i32
    %c0_i32_1 = arith.constant 0 : i32
    return %c0_i32, %c0_i32_0 : i32, i32
  }
  func.func @transform_2(%arg0: i32) -> (i32, i32) {
    %c0_i32 = arith.constant 0 : i32
    %c0_i32_0 = arith.constant 0 : i32
    %c0_i32_1 = arith.constant 0 : i32
    return %c0_i32, %c0_i32_0 : i32, i32
  }
  func.func @transform_3(%arg0: i32) -> (i32, i32, i32) {
    %c0_i32 = arith.constant 0 : i32
    %c0_i32_0 = arith.constant 0 : i32
    %c0_i32_1 = arith.constant 0 : i32
    return %arg0, %c0_i32, %c0_i32_0 : i32, i32, i32
  }
}

</mosaic_0001>

<llo_original>
// kernel: temporal_conv_layer.1
$region0: #{temporal_conv_layer.1}
  #allocation0 [shape = 'u32[]', space=smem, size = 0x4, offset = 0x4, fixed_abs, tag = 'smem constant byte address 0x4 - core index']
  #allocation1 [shape = 'u32[144,128]{1,0:T(1,128)}', space=vmem, size = 0x12000, scoped, tag = 'internal scratch']
  %s0 = inlined_call_operand.vmem [shape: f32[2,8,128], index: 0, kind: input, shape index: {}]
  %s1 = inlined_call_operand.vmem [shape: f32[24,8], index: 1, kind: input, shape index: {}]
  %s2 = inlined_call_operand.vmem [shape: f32[1,8], index: 2, kind: input, shape index: {}]
  %s3 = inlined_call_operand.vmem [shape: f32[2,4,96], index: 3, kind: output, shape index: {}]
  %s4 = sld [smem:[#allocation0]]
  $region22: #{temporal_conv_layer.1} parent=0
    _
  %s6 = ssub.s32 1, %s4
  %s7 = scalar_select 0, %s6, %s4
  // Predicated region
  $region2: #{temporal_conv_layer.1} parent=0 // pred_check
    _
  $region3: #{temporal_conv_layer.1} parent=0 // pred_check_branch
    %9 = sbr.rel (0) target = $region5
  $region4: #{temporal_conv_layer.1} parent=0 // pred_region
    _
  $region5: #{temporal_conv_layer.1} parent=0 // pred_fallthru
    _
  // Predicated region
  $region6: #{temporal_conv_layer.1} parent=0 // pred_check
    _
  $region7: #{temporal_conv_layer.1} parent=0 // pred_check_branch
    %11 = sbr.rel (0) target = $region9
  $region8: #{temporal_conv_layer.1} parent=0 // pred_region
    _
  $region9: #{temporal_conv_layer.1} parent=0 // pred_fallthru
    _
  // Predicated region
  $region10: #{temporal_conv_layer.1} parent=0 // pred_check
    _
  $region11: #{temporal_conv_layer.1} parent=0 // pred_check_branch
    %13 = sbr.rel (0) target = $region13
  $region12: #{temporal_conv_layer.1} parent=0 // pred_region
    _
  $region13: #{temporal_conv_layer.1} parent=0 // pred_fallthru
    _
  %v14 = vld [vmem:[%s0] sm:$0xff]
  %v15 = vld [vmem:[%s0 + $0x8] sm:$0xff]
  %16 = vxpose.xlu0.b32.start [1/16] %v14, 128
  %17 = vxpose.xlu0.b32.cont [2/16] 0.0, 128
  %18 = vxpose.xlu0.b32.cont [3/16] 0.0, 128
  %19 = vxpose.xlu0.b32.cont [4/16] 0.0, 128
  %20 = vxpose.xlu0.b32.cont [5/16] 0.0, 128
  %21 = vxpose.xlu0.b32.cont [6/16] 0.0, 128
  %22 = vxpose.xlu0.b32.cont [7/16] 0.0, 128
  %23 = vxpose.xlu0.b32.cont [8/16] 0.0, 128
  %24 = vxpose.xlu0.b32.cont [9/16] 0.0, 128
  %25 = vxpose.xlu0.b32.cont [10/16] 0.0, 128
  %26 = vxpose.xlu0.b32.cont [11/16] 0.0, 128
  %27 = vxpose.xlu0.b32.cont [12/16] 0.0, 128
  %28 = vxpose.xlu0.b32.cont [13/16] 0.0, 128
  %29 = vxpose.xlu0.b32.cont [14/16] 0.0, 128
  %30 = vxpose.xlu0.b32.cont [15/16] 0.0, 128
  %31 = vxpose.xlu0.b32.end [16/16] 0.0, 128
  %v32 = vpop.trf.xlu0
  %v33 = vpop.trf.xlu0
  %v34 = vpop.trf.xlu0
  %v35 = vpop.trf.xlu0
  %v36 = vpop.trf.xlu0
  %v37 = vpop.trf.xlu0
  %v38 = vpop.trf.xlu0
  %v39 = vpop.trf.xlu0
  %v40 = vpop.trf.xlu0
  %v41 = vpop.trf.xlu0
  %v42 = vpop.trf.xlu0
  %v43 = vpop.trf.xlu0
  %v44 = vpop.trf.xlu0
  %v45 = vpop.trf.xlu0
  %v46 = vpop.trf.xlu0
  %v47 = vpop.trf.xlu0
  %48 = vxpose.xlu0.b32.start [1/16] %v15, 128
  %49 = vxpose.xlu0.b32.cont [2/16] 0.0, 128
  %50 = vxpose.xlu0.b32.cont [3/16] 0.0, 128
  %51 = vxpose.xlu0.b32.cont [4/16] 0.0, 128
  %52 = vxpose.xlu0.b32.cont [5/16] 0.0, 128
  %53 = vxpose.xlu0.b32.cont [6/16] 0.0, 128
  %54 = vxpose.xlu0.b32.cont [7/16] 0.0, 128
  %55 = vxpose.xlu0.b32.cont [8/16] 0.0, 128
  %56 = vxpose.xlu0.b32.cont [9/16] 0.0, 128
  %57 = vxpose.xlu0.b32.cont [10/16] 0.0, 128
  %58 = vxpose.xlu0.b32.cont [11/16] 0.0, 128
  %59 = vxpose.xlu0.b32.cont [12/16] 0.0, 128
  %60 = vxpose.xlu0.b32.cont [13/16] 0.0, 128
  %61 = vxpose.xlu0.b32.cont [14/16] 0.0, 128
  %62 = vxpose.xlu0.b32.cont [15/16] 0.0, 128
  %63 = vxpose.xlu0.b32.end [16/16] 0.0, 128
  %v64 = vpop.trf.xlu0
  %v65 = vpop.trf.xlu0
  %v66 = vpop.trf.xlu0
  %v67 = vpop.trf.xlu0
  %v68 = vpop.trf.xlu0
  %v69 = vpop.trf.xlu0
  %v70 = vpop.trf.xlu0
  %v71 = vpop.trf.xlu0
  %v72 = vpop.trf.xlu0
  %v73 = vpop.trf.xlu0
  %v74 = vpop.trf.xlu0
  %v75 = vpop.trf.xlu0
  %v76 = vpop.trf.xlu0
  %v77 = vpop.trf.xlu0
  %v78 = vpop.trf.xlu0
  %v79 = vpop.trf.xlu0
  %v80 = vld [vmem:[%s2] sm:$0x1]
  %v81 = vld [vmem:[%s1] sm:$0xff]
  %v82 = vld [vmem:[%s1 + $0x8] sm:$0xff]
  %vm83 = vcmask 64512
  %v85 = vsel %vm83, %v34, 0
  %v88 = vsel %vm83, %v35, 0
  %v91 = vsel %vm83, %v36, 0
  %v94 = vsel %vm83, %v37, 0
  %v97 = vsel %vm83, %v38, 0
  %v100 = vsel %vm83, %v39, 0
  %v103 = vsel %vm83, %v40, 0
  %v106 = vsel %vm83, %v41, 0
  %v109 = vsel %vm83, %v42, 0
  %v112 = vsel %vm83, %v43, 0
  %v115 = vsel %vm83, %v44, 0
  %v118 = vsel %vm83, %v45, 0
  %v121 = vsel %vm83, %v66, 0
  %v124 = vsel %vm83, %v67, 0
  %v127 = vsel %vm83, %v68, 0
  %v130 = vsel %vm83, %v69, 0
  %v133 = vsel %vm83, %v70, 0
  %v136 = vsel %vm83, %v71, 0
  %v139 = vsel %vm83, %v72, 0
  %v142 = vsel %vm83, %v73, 0
  %v145 = vsel %vm83, %v74, 0
  %v148 = vsel %vm83, %v75, 0
  %v151 = vsel %vm83, %v76, 0
  %v154 = vsel %vm83, %v77, 0
  %156 = vmatprep.subr.mxu0 0.0
  %157 = vmatpush1.msra.mxu0 0.0
  %158 = vmatprep.subr.mxu0 0.0
  %159 = vmatpush1.msra.mxu0 0.0
  %160 = vmatprep.subr.mxu0 0.0
  %161 = vmatpush1.msra.mxu0 0.0
  %162 = vmatprep.subr.mxu0 0.0
  %163 = vmatpush1.msra.mxu0 0.0
  %164 = vmatprep.subr.mxu0 0.0
  %165 = vmatpush1.msra.mxu0 0.0
  %166 = vmatprep.subr.mxu0 0.0
  %167 = vmatpush1.msra.mxu0 0.0
  %168 = vmatprep.subr.mxu0 0.0
  %169 = vmatpush1.msra.mxu0 0.0
  %170 = vmatprep.subr.mxu0 0.0
  %171 = vmatpush1.msra.mxu0 0.0
  %172 = vmatprep.subr.mxu0 0.0
  %173 = vmatpush1.msra.mxu0 0.0
  %174 = vmatprep.subr.mxu0 0.0
  %175 = vmatpush1.msra.mxu0 0.0
  %176 = vmatprep.subr.mxu0 0.0
  %177 = vmatpush1.msra.mxu0 0.0
  %178 = vmatprep.subr.mxu0 0.0
  %179 = vmatpush1.msra.mxu0 0.0
  %180 = vmatprep.subr.mxu0 0.0
  %181 = vmatpush1.msra.mxu0 0.0
  %182 = vmatprep.subr.mxu0 0.0
  %183 = vmatpush1.msra.mxu0 0.0
  %184 = vmatprep.subr.mxu0 0.0
  %185 = vmatpush1.msra.mxu0 0.0
  %186 = vmatprep.subr.mxu0 0.0
  %187 = vmatpush1.msra.mxu0 %v82
  %188 = vmatprep.subr.mxu0 0.0
  %189 = vmatpush2.msra.mxu0 0.0
  %190 = vmatprep.subr.mxu0 0.0
  %191 = vmatpush2.msra.mxu0 0.0
  %192 = vmatprep.subr.mxu0 0.0
  %193 = vmatpush2.msra.mxu0 0.0
  %194 = vmatprep.subr.mxu0 0.0
  %195 = vmatpush2.msra.mxu0 0.0
  %196 = vmatprep.subr.mxu0 0.0
  %197 = vmatpush2.msra.mxu0 0.0
  %198 = vmatprep.subr.mxu0 0.0
  %199 = vmatpush2.msra.mxu0 0.0
  %200 = vmatprep.subr.mxu0 0.0
  %201 = vmatpush2.msra.mxu0 0.0
  %202 = vmatprep.subr.mxu0 0.0
  %203 = vmatpush2.msra.mxu0 0.0
  %204 = vmatprep.subr.mxu0 0.0
  %205 = vmatpush2.msra.mxu0 0.0
  %206 = vmatprep.subr.mxu0 0.0
  %207 = vmatpush2.msra.mxu0 0.0
  %208 = vmatprep.subr.mxu0 0.0
  %209 = vmatpush2.msra.mxu0 0.0
  %210 = vmatprep.subr.mxu0 0.0
  %211 = vmatpush2.msra.mxu0 0.0
  %212 = vmatprep.subr.mxu0 0.0
  %213 = vmatpush2.msra.mxu0 0.0
  %214 = vmatprep.subr.mxu0 0.0
  %215 = vmatpush2.msra.mxu0 0.0
  %216 = vmatprep.subr.mxu0 0.0
  %217 = vmatpush2.msra.mxu0 0.0
  %218 = vmatprep.subr.mxu0 0.0
  %219 = vmatpush2.msra.mxu0 0.0
  %220 = vmatprep.mubr.f32.mxu0 0.0
  %221 = vmatmul.mubr.f32.gmra.mxu0 %v85
  %v222 = vpop.f32.mrf.mxu0
  %v223 = vadd.f32 0.0, %v222
  %v224 = vpop.f32.mrf.mxu0
  %225 = vmatprep.mubr.f32.mxu0 0.0
  %226 = vmatmul.mubr.f32.gmra.mxu0 %v88
  %v227 = vpop.f32.mrf.mxu0
  %v228 = vadd.f32 0.0, %v227
  %v229 = vpop.f32.mrf.mxu0
  %230 = vmatprep.mubr.f32.mxu0 0.0
  %231 = vmatmul.mubr.f32.gmra.mxu0 %v91
  %v232 = vpop.f32.mrf.mxu0
  %v233 = vadd.f32 0.0, %v232
  %v234 = vpop.f32.mrf.mxu0
  %235 = vmatprep.mubr.f32.mxu0 0.0
  %236 = vmatmul.mubr.f32.gmra.mxu0 %v94
  %v237 = vpop.f32.mrf.mxu0
  %v238 = vadd.f32 0.0, %v237
  %v239 = vpop.f32.mrf.mxu0
  %240 = vmatprep.mubr.f32.mxu0 0.0
  %241 = vmatmul.mubr.f32.gmra.mxu0 %v97
  %v242 = vpop.f32.mrf.mxu0
  %v243 = vadd.f32 0.0, %v242
  %v244 = vpop.f32.mrf.mxu0
  %245 = vmatprep.mubr.f32.mxu0 0.0
  %246 = vmatmul.mubr.f32.gmra.mxu0 %v100
  %v247 = vpop.f32.mrf.mxu0
  %v248 = vadd.f32 0.0, %v247
  %v249 = vpop.f32.mrf.mxu0
  %250 = vmatprep.mubr.f32.mxu0 0.0
  %251 = vmatmul.mubr.f32.gmra.mxu0 %v103
  %v252 = vpop.f32.mrf.mxu0
  %v253 = vadd.f32 0.0, %v252
  %v254 = vpop.f32.mrf.mxu0
  %255 = vmatprep.mubr.f32.mxu0 0.0
  %256 = vmatmul.mubr.f32.gmra.mxu0 %v106
  %v257 = vpop.f32.mrf.mxu0
  %v258 = vadd.f32 0.0, %v257
  %v259 = vpop.f32.mrf.mxu0
  %260 = vmatprep.mubr.f32.mxu0 0.0
  %261 = vmatmul.mubr.f32.gmra.mxu0 %v109
  %v262 = vpop.f32.mrf.mxu0
  %v263 = vadd.f32 0.0, %v262
  %v264 = vpop.f32.mrf.mxu0
  %265 = vmatprep.mubr.f32.mxu0 0.0
  %266 = vmatmul.mubr.f32.gmra.mxu0 %v112
  %v267 = vpop.f32.mrf.mxu0
  %v268 = vadd.f32 0.0, %v267
  %v269 = vpop.f32.mrf.mxu0
  %270 = vmatprep.mubr.f32.mxu0 0.0
  %271 = vmatmul.mubr.f32.gmra.mxu0 %v115
  %v272 = vpop.f32.mrf.mxu0
  %v273 = vadd.f32 0.0, %v272
  %v274 = vpop.f32.mrf.mxu0
  %275 = vmatprep.mubr.f32.mxu0 0.0
  %276 = vmatmul.mubr.f32.gmra.mxu0 %v118
  %v277 = vpop.f32.mrf.mxu0
  %v278 = vadd.f32 0.0, %v277
  %v279 = vpop.f32.mrf.mxu0
  %280 = vmatprep.mubr.f32.mxu0 0.0
  %281 = vmatmul.mubr.f32.gmra.mxu0 %v121
  %v282 = vpop.f32.mrf.mxu0
  %v283 = vadd.f32 0.0, %v282
  %v284 = vpop.f32.mrf.mxu0
  %285 = vmatprep.mubr.f32.mxu0 0.0
  %286 = vmatmul.mubr.f32.gmra.mxu0 %v124
  %v287 = vpop.f32.mrf.mxu0
  %v288 = vadd.f32 0.0, %v287
  %v289 = vpop.f32.mrf.mxu0
  %290 = vmatprep.mubr.f32.mxu0 0.0
  %291 = vmatmul.mubr.f32.gmra.mxu0 %v127
  %v292 = vpop.f32.mrf.mxu0
  %v293 = vadd.f32 0.0, %v292
  %v294 = vpop.f32.mrf.mxu0
  %295 = vmatprep.mubr.f32.mxu0 0.0
  %296 = vmatmul.mubr.f32.gmra.mxu0 %v130
  %v297 = vpop.f32.mrf.mxu0
  %v298 = vadd.f32 0.0, %v297
  %v299 = vpop.f32.mrf.mxu0
  %300 = vmatprep.mubr.f32.mxu0 0.0
  %301 = vmatmul.mubr.f32.gmra.mxu0 %v133
  %v302 = vpop.f32.mrf.mxu0
  %v303 = vadd.f32 0.0, %v302
  %v304 = vpop.f32.mrf.mxu0
  %305 = vmatprep.mubr.f32.mxu0 0.0
  %306 = vmatmul.mubr.f32.gmra.mxu0 %v136
  %v307 = vpop.f32.mrf.mxu0
  %v308 = vadd.f32 0.0, %v307
  %v309 = vpop.f32.mrf.mxu0
  %310 = vmatprep.mubr.f32.mxu0 0.0
  %311 = vmatmul.mubr.f32.gmra.mxu0 %v139
  %v312 = vpop.f32.mrf.mxu0
  %v313 = vadd.f32 0.0, %v312
  %v314 = vpop.f32.mrf.mxu0
  %315 = vmatprep.mubr.f32.mxu0 0.0
  %316 = vmatmul.mubr.f32.gmra.mxu0 %v142
  %v317 = vpop.f32.mrf.mxu0
  %v318 = vadd.f32 0.0, %v317
  %v319 = vpop.f32.mrf.mxu0
  %320 = vmatprep.mubr.f32.mxu0 0.0
  %321 = vmatmul.mubr.f32.gmra.mxu0 %v145
  %v322 = vpop.f32.mrf.mxu0
  %v323 = vadd.f32 0.0, %v322
  %v324 = vpop.f32.mrf.mxu0
  %325 = vmatprep.mubr.f32.mxu0 0.0
  %326 = vmatmul.mubr.f32.gmra.mxu0 %v148
  %v327 = vpop.f32.mrf.mxu0
  %v328 = vadd.f32 0.0, %v327
  %v329 = vpop.f32.mrf.mxu0
  %330 = vmatprep.mubr.f32.mxu0 0.0
  %331 = vmatmul.mubr.f32.gmra.mxu0 %v151
  %v332 = vpop.f32.mrf.mxu0
  %v333 = vadd.f32 0.0, %v332
  %v334 = vpop.f32.mrf.mxu0
  %335 = vmatprep.mubr.f32.mxu0 0.0
  %336 = vmatmul.mubr.f32.gmra.mxu0 %v154
  %v337 = vpop.f32.mrf.mxu0
  %v338 = vadd.f32 0.0, %v337
  %v339 = vpop.f32.mrf.mxu0
  %340 = vdwg.mxu0
  %v342 = vsel %vm83, %v32, 0
  %v345 = vsel %vm83, %v33, 0
  %v348 = vsel %vm83, %v64, 0
  %v351 = vsel %vm83, %v65, 0
  %353 = vmatprep.subr.mxu0 0.0
  %354 = vmatpush1.msra.mxu0 0.0
  %355 = vmatprep.subr.mxu0 0.0
  %356 = vmatpush1.msra.mxu0 0.0
  %357 = vmatprep.subr.mxu0 0.0
  %358 = vmatpush1.msra.mxu0 0.0
  %359 = vmatprep.subr.mxu0 0.0
  %360 = vmatpush1.msra.mxu0 0.0
  %361 = vmatprep.subr.mxu0 0.0
  %362 = vmatpush1.msra.mxu0 0.0
  %363 = vmatprep.subr.mxu0 0.0
  %364 = vmatpush1.msra.mxu0 0.0
  %365 = vmatprep.subr.mxu0 0.0
  %366 = vmatpush1.msra.mxu0 0.0
  %367 = vmatprep.subr.mxu0 0.0
  %368 = vmatpush1.msra.mxu0 0.0
  %369 = vmatprep.subr.mxu0 0.0
  %370 = vmatpush1.msra.mxu0 0.0
  %371 = vmatprep.subr.mxu0 0.0
  %372 = vmatpush1.msra.mxu0 0.0
  %373 = vmatprep.subr.mxu0 0.0
  %374 = vmatpush1.msra.mxu0 0.0
  %375 = vmatprep.subr.mxu0 0.0
  %376 = vmatpush1.msra.mxu0 0.0
  %377 = vmatprep.subr.mxu0 0.0
  %378 = vmatpush1.msra.mxu0 0.0
  %379 = vmatprep.subr.mxu0 0.0
  %380 = vmatpush1.msra.mxu0 0.0
  %381 = vmatprep.subr.mxu0 0.0
  %382 = vmatpush1.msra.mxu0 0.0
  %383 = vmatprep.subr.mxu0 0.0
  %384 = vmatpush1.msra.mxu0 %v81
  %385 = vmatprep.subr.mxu0 0.0
  %386 = vmatpush2.msra.mxu0 0.0
  %387 = vmatprep.subr.mxu0 0.0
  %388 = vmatpush2.msra.mxu0 0.0
  %389 = vmatprep.subr.mxu0 0.0
  %390 = vmatpush2.msra.mxu0 0.0
  %391 = vmatprep.subr.mxu0 0.0
  %392 = vmatpush2.msra.mxu0 0.0
  %393 = vmatprep.subr.mxu0 0.0
  %394 = vmatpush2.msra.mxu0 0.0
  %395 = vmatprep.subr.mxu0 0.0
  %396 = vmatpush2.msra.mxu0 0.0
  %397 = vmatprep.subr.mxu0 0.0
  %398 = vmatpush2.msra.mxu0 0.0
  %399 = vmatprep.subr.mxu0 0.0
  %400 = vmatpush2.msra.mxu0 0.0
  %401 = vmatprep.subr.mxu0 0.0
  %402 = vmatpush2.msra.mxu0 0.0
  %403 = vmatprep.subr.mxu0 0.0
  %404 = vmatpush2.msra.mxu0 0.0
  %405 = vmatprep.subr.mxu0 0.0
  %406 = vmatpush2.msra.mxu0 0.0
  %407 = vmatprep.subr.mxu0 0.0
  %408 = vmatpush2.msra.mxu0 0.0
  %409 = vmatprep.subr.mxu0 0.0
  %410 = vmatpush2.msra.mxu0 0.0
  %411 = vmatprep.subr.mxu0 0.0
  %412 = vmatpush2.msra.mxu0 0.0
  %413 = vmatprep.subr.mxu0 0.0
  %414 = vmatpush2.msra.mxu0 0.0
  %415 = vmatprep.subr.mxu0 0.0
  %416 = vmatpush2.msra.mxu0 0.0
  %417 = vmatprep.mubr.f32.mxu0 0.0
  %418 = vmatmul.mubr.f32.gmra.mxu0 %v342
  %v419 = vpop.f32.mrf.mxu0
  %v420 = vadd.f32 %v223, %v419
  %v421 = vpop.f32.mrf.mxu0
  %422 = vmatprep.mubr.f32.mxu0 0.0
  %423 = vmatmul.mubr.f32.gmra.mxu0 %v345
  %v424 = vpop.f32.mrf.mxu0
  %v425 = vadd.f32 %v228, %v424
  %v426 = vpop.f32.mrf.mxu0
  %427 = vmatprep.mubr.f32.mxu0 0.0
  %428 = vmatmul.mubr.f32.gmra.mxu0 %v85
  %v429 = vpop.f32.mrf.mxu0
  %v430 = vadd.f32 %v233, %v429
  %v431 = vpop.f32.mrf.mxu0
  %432 = vmatprep.mubr.f32.mxu0 0.0
  %433 = vmatmul.mubr.f32.gmra.mxu0 %v88
  %v434 = vpop.f32.mrf.mxu0
  %v435 = vadd.f32 %v238, %v434
  %v436 = vpop.f32.mrf.mxu0
  %437 = vmatprep.mubr.f32.mxu0 0.0
  %438 = vmatmul.mubr.f32.gmra.mxu0 %v91
  %v439 = vpop.f32.mrf.mxu0
  %v440 = vadd.f32 %v243, %v439
  %v441 = vpop.f32.mrf.mxu0
  %442 = vmatprep.mubr.f32.mxu0 0.0
  %443 = vmatmul.mubr.f32.gmra.mxu0 %v94
  %v444 = vpop.f32.mrf.mxu0
  %v445 = vadd.f32 %v248, %v444
  %v446 = vpop.f32.mrf.mxu0
  %447 = vmatprep.mubr.f32.mxu0 0.0
  %448 = vmatmul.mubr.f32.gmra.mxu0 %v97
  %v449 = vpop.f32.mrf.mxu0
  %v450 = vadd.f32 %v253, %v449
  %v451 = vpop.f32.mrf.mxu0
  %452 = vmatprep.mubr.f32.mxu0 0.0
  %453 = vmatmul.mubr.f32.gmra.mxu0 %v100
  %v454 = vpop.f32.mrf.mxu0
  %v455 = vadd.f32 %v258, %v454
  %v456 = vpop.f32.mrf.mxu0
  %457 = vmatprep.mubr.f32.mxu0 0.0
  %458 = vmatmul.mubr.f32.gmra.mxu0 %v103
  %v459 = vpop.f32.mrf.mxu0
  %v460 = vadd.f32 %v263, %v459
  %v461 = vpop.f32.mrf.mxu0
  %462 = vmatprep.mubr.f32.mxu0 0.0
  %463 = vmatmul.mubr.f32.gmra.mxu0 %v106
  %v464 = vpop.f32.mrf.mxu0
  %v465 = vadd.f32 %v268, %v464
  %v466 = vpop.f32.mrf.mxu0
  %467 = vmatprep.mubr.f32.mxu0 0.0
  %468 = vmatmul.mubr.f32.gmra.mxu0 %v109
  %v469 = vpop.f32.mrf.mxu0
  %v470 = vadd.f32 %v273, %v469
  %v471 = vpop.f32.mrf.mxu0
  %472 = vmatprep.mubr.f32.mxu0 0.0
  %473 = vmatmul.mubr.f32.gmra.mxu0 %v112
  %v474 = vpop.f32.mrf.mxu0
  %v475 = vadd.f32 %v278, %v474
  %v476 = vpop.f32.mrf.mxu0
  %477 = vmatprep.mubr.f32.mxu0 0.0
  %478 = vmatmul.mubr.f32.gmra.mxu0 %v348
  %v479 = vpop.f32.mrf.mxu0
  %v480 = vadd.f32 %v283, %v479
  %v481 = vpop.f32.mrf.mxu0
  %482 = vmatprep.mubr.f32.mxu0 0.0
  %483 = vmatmul.mubr.f32.gmra.mxu0 %v351
  %v484 = vpop.f32.mrf.mxu0
  %v485 = vadd.f32 %v288, %v484
  %v486 = vpop.f32.mrf.mxu0
  %487 = vmatprep.mubr.f32.mxu0 0.0
  %488 = vmatmul.mubr.f32.gmra.mxu0 %v121
  %v489 = vpop.f32.mrf.mxu0
  %v490 = vadd.f32 %v293, %v489
  %v491 = vpop.f32.mrf.mxu0
  %492 = vmatprep.mubr.f32.mxu0 0.0
  %493 = vmatmul.mubr.f32.gmra.mxu0 %v124
  %v494 = vpop.f32.mrf.mxu0
  %v495 = vadd.f32 %v298, %v494
  %v496 = vpop.f32.mrf.mxu0
  %497 = vmatprep.mubr.f32.mxu0 0.0
  %498 = vmatmul.mubr.f32.gmra.mxu0 %v127
  %v499 = vpop.f32.mrf.mxu0
  %v500 = vadd.f32 %v303, %v499
  %v501 = vpop.f32.mrf.mxu0
  %502 = vmatprep.mubr.f32.mxu0 0.0
  %503 = vmatmul.mubr.f32.gmra.mxu0 %v130
  %v504 = vpop.f32.mrf.mxu0
  %v505 = vadd.f32 %v308, %v504
  %v506 = vpop.f32.mrf.mxu0
  %507 = vmatprep.mubr.f32.mxu0 0.0
  %508 = vmatmul.mubr.f32.gmra.mxu0 %v133
  %v509 = vpop.f32.mrf.mxu0
  %v510 = vadd.f32 %v313, %v509
  %v511 = vpop.f32.mrf.mxu0
  %512 = vmatprep.mubr.f32.mxu0 0.0
  %513 = vmatmul.mubr.f32.gmra.mxu0 %v136
  %v514 = vpop.f32.mrf.mxu0
  %v515 = vadd.f32 %v318, %v514
  %v516 = vpop.f32.mrf.mxu0
  %517 = vmatprep.mubr.f32.mxu0 0.0
  %518 = vmatmul.mubr.f32.gmra.mxu0 %v139
  %v519 = vpop.f32.mrf.mxu0
  %v520 = vadd.f32 %v323, %v519
  %v521 = vpop.f32.mrf.mxu0
  %522 = vmatprep.mubr.f32.mxu0 0.0
  %523 = vmatmul.mubr.f32.gmra.mxu0 %v142
  %v524 = vpop.f32.mrf.mxu0
  %v525 = vadd.f32 %v328, %v524
  %v526 = vpop.f32.mrf.mxu0
  %527 = vmatprep.mubr.f32.mxu0 0.0
  %528 = vmatmul.mubr.f32.gmra.mxu0 %v145
  %v529 = vpop.f32.mrf.mxu0
  %v530 = vadd.f32 %v333, %v529
  %v531 = vpop.f32.mrf.mxu0
  %532 = vmatprep.mubr.f32.mxu0 0.0
  %533 = vmatmul.mubr.f32.gmra.mxu0 %v148
  %v534 = vpop.f32.mrf.mxu0
  %v535 = vadd.f32 %v338, %v534
  %v536 = vpop.f32.mrf.mxu0
  %537 = vdwg.mxu0
  %v538 = vld [vmem:[%s1 + $0x10] sm:$0xff]
  %v540 = vsel %vm83, %v46, 0
  %v543 = vsel %vm83, %v47, 0
  %v546 = vsel %vm83, %v78, 0
  %v549 = vsel %vm83, %v79, 0
  %551 = vmatprep.subr.mxu0 0.0
  %552 = vmatpush1.msra.mxu0 0.0
  %553 = vmatprep.subr.mxu0 0.0
  %554 = vmatpush1.msra.mxu0 0.0
  %555 = vmatprep.subr.mxu0 0.0
  %556 = vmatpush1.msra.mxu0 0.0
  %557 = vmatprep.subr.mxu0 0.0
  %558 = vmatpush1.msra.mxu0 0.0
  %559 = vmatprep.subr.mxu0 0.0
  %560 = vmatpush1.msra.mxu0 0.0
  %561 = vmatprep.subr.mxu0 0.0
  %562 = vmatpush1.msra.mxu0 0.0
  %563 = vmatprep.subr.mxu0 0.0
  %564 = vmatpush1.msra.mxu0 0.0
  %565 = vmatprep.subr.mxu0 0.0
  %566 = vmatpush1.msra.mxu0 0.0
  %567 = vmatprep.subr.mxu0 0.0
  %568 = vmatpush1.msra.mxu0 0.0
  %569 = vmatprep.subr.mxu0 0.0
  %570 = vmatpush1.msra.mxu0 0.0
  %571 = vmatprep.subr.mxu0 0.0
  %572 = vmatpush1.msra.mxu0 0.0
  %573 = vmatprep.subr.mxu0 0.0
  %574 = vmatpush1.msra.mxu0 0.0
  %575 = vmatprep.subr.mxu0 0.0
  %576 = vmatpush1.msra.mxu0 0.0
  %577 = vmatprep.subr.mxu0 0.0
  %578 = vmatpush1.msra.mxu0 0.0
  %579 = vmatprep.subr.mxu0 0.0
  %580 = vmatpush1.msra.mxu0 0.0
  %581 = vmatprep.subr.mxu0 0.0
  %582 = vmatpush1.msra.mxu0 %v538
  %583 = vmatprep.subr.mxu0 0.0
  %584 = vmatpush2.msra.mxu0 0.0
  %585 = vmatprep.subr.mxu0 0.0
  %586 = vmatpush2.msra.mxu0 0.0
  %587 = vmatprep.subr.mxu0 0.0
  %588 = vmatpush2.msra.mxu0 0.0
  %589 = vmatprep.subr.mxu0 0.0
  %590 = vmatpush2.msra.mxu0 0.0
  %591 = vmatprep.subr.mxu0 0.0
  %592 = vmatpush2.msra.mxu0 0.0
  %593 = vmatprep.subr.mxu0 0.0
  %594 = vmatpush2.msra.mxu0 0.0
  %595 = vmatprep.subr.mxu0 0.0
  %596 = vmatpush2.msra.mxu0 0.0
  %597 = vmatprep.subr.mxu0 0.0
  %598 = vmatpush2.msra.mxu0 0.0
  %599 = vmatprep.subr.mxu0 0.0
  %600 = vmatpush2.msra.mxu0 0.0
  %601 = vmatprep.subr.mxu0 0.0
  %602 = vmatpush2.msra.mxu0 0.0
  %603 = vmatprep.subr.mxu0 0.0
  %604 = vmatpush2.msra.mxu0 0.0
  %605 = vmatprep.subr.mxu0 0.0
  %606 = vmatpush2.msra.mxu0 0.0
  %607 = vmatprep.subr.mxu0 0.0
  %608 = vmatpush2.msra.mxu0 0.0
  %609 = vmatprep.subr.mxu0 0.0
  %610 = vmatpush2.msra.mxu0 0.0
  %611 = vmatprep.subr.mxu0 0.0
  %612 = vmatpush2.msra.mxu0 0.0
  %613 = vmatprep.subr.mxu0 0.0
  %614 = vmatpush2.msra.mxu0 0.0
  %615 = vmatprep.mubr.f32.mxu0 0.0
  %616 = vmatmul.mubr.f32.gmra.mxu0 %v91
  %v617 = vpop.f32.mrf.mxu0
  %v618 = vadd.f32 0.0, %v617
  %v619 = vpop.f32.mrf.mxu0
  %620 = vmatprep.mubr.f32.mxu0 0.0
  %621 = vmatmul.mubr.f32.gmra.mxu0 %v94
  %v622 = vpop.f32.mrf.mxu0
  %v623 = vadd.f32 0.0, %v622
  %v624 = vpop.f32.mrf.mxu0
  %625 = vmatprep.mubr.f32.mxu0 0.0
  %626 = vmatmul.mubr.f32.gmra.mxu0 %v97
  %v627 = vpop.f32.mrf.mxu0
  %v628 = vadd.f32 0.0, %v627
  %v629 = vpop.f32.mrf.mxu0
  %630 = vmatprep.mubr.f32.mxu0 0.0
  %631 = vmatmul.mubr.f32.gmra.mxu0 %v100
  %v632 = vpop.f32.mrf.mxu0
  %v633 = vadd.f32 0.0, %v632
  %v634 = vpop.f32.mrf.mxu0
  %635 = vmatprep.mubr.f32.mxu0 0.0
  %636 = vmatmul.mubr.f32.gmra.mxu0 %v103
  %v637 = vpop.f32.mrf.mxu0
  %v638 = vadd.f32 0.0, %v637
  %v639 = vpop.f32.mrf.mxu0
  %640 = vmatprep.mubr.f32.mxu0 0.0
  %641 = vmatmul.mubr.f32.gmra.mxu0 %v106
  %v642 = vpop.f32.mrf.mxu0
  %v643 = vadd.f32 0.0, %v642
  %v644 = vpop.f32.mrf.mxu0
  %645 = vmatprep.mubr.f32.mxu0 0.0
  %646 = vmatmul.mubr.f32.gmra.mxu0 %v109
  %v647 = vpop.f32.mrf.mxu0
  %v648 = vadd.f32 0.0, %v647
  %v649 = vpop.f32.mrf.mxu0
  %650 = vmatprep.mubr.f32.mxu0 0.0
  %651 = vmatmul.mubr.f32.gmra.mxu0 %v112
  %v652 = vpop.f32.mrf.mxu0
  %v653 = vadd.f32 0.0, %v652
  %v654 = vpop.f32.mrf.mxu0
  %655 = vmatprep.mubr.f32.mxu0 0.0
  %656 = vmatmul.mubr.f32.gmra.mxu0 %v115
  %v657 = vpop.f32.mrf.mxu0
  %v658 = vadd.f32 0.0, %v657
  %v659 = vpop.f32.mrf.mxu0
  %660 = vmatprep.mubr.f32.mxu0 0.0
  %661 = vmatmul.mubr.f32.gmra.mxu0 %v118
  %v662 = vpop.f32.mrf.mxu0
  %v663 = vadd.f32 0.0, %v662
  %v664 = vpop.f32.mrf.mxu0
  %665 = vmatprep.mubr.f32.mxu0 0.0
  %666 = vmatmul.mubr.f32.gmra.mxu0 %v540
  %v667 = vpop.f32.mrf.mxu0
  %v668 = vadd.f32 0.0, %v667
  %v669 = vpop.f32.mrf.mxu0
  %670 = vmatprep.mubr.f32.mxu0 0.0
  %671 = vmatmul.mubr.f32.gmra.mxu0 %v543
  %v672 = vpop.f32.mrf.mxu0
  %v673 = vadd.f32 0.0, %v672
  %v674 = vpop.f32.mrf.mxu0
  %675 = vmatprep.mubr.f32.mxu0 0.0
  %676 = vmatmul.mubr.f32.gmra.mxu0 %v127
  %v677 = vpop.f32.mrf.mxu0
  %v678 = vadd.f32 0.0, %v677
  %v679 = vpop.f32.mrf.mxu0
  %680 = vmatprep.mubr.f32.mxu0 0.0
  %681 = vmatmul.mubr.f32.gmra.mxu0 %v130
  %v682 = vpop.f32.mrf.mxu0
  %v683 = vadd.f32 0.0, %v682
  %v684 = vpop.f32.mrf.mxu0
  %685 = vmatprep.mubr.f32.mxu0 0.0
  %686 = vmatmul.mubr.f32.gmra.mxu0 %v133
  %v687 = vpop.f32.mrf.mxu0
  %v688 = vadd.f32 0.0, %v687
  %v689 = vpop.f32.mrf.mxu0
  %690 = vmatprep.mubr.f32.mxu0 0.0
  %691 = vmatmul.mubr.f32.gmra.mxu0 %v136
  %v692 = vpop.f32.mrf.mxu0
  %v693 = vadd.f32 0.0, %v692
  %v694 = vpop.f32.mrf.mxu0
  %695 = vmatprep.mubr.f32.mxu0 0.0
  %696 = vmatmul.mubr.f32.gmra.mxu0 %v139
  %v697 = vpop.f32.mrf.mxu0
  %v698 = vadd.f32 0.0, %v697
  %v699 = vpop.f32.mrf.mxu0
  %700 = vmatprep.mubr.f32.mxu0 0.0
  %701 = vmatmul.mubr.f32.gmra.mxu0 %v142
  %v702 = vpop.f32.mrf.mxu0
  %v703 = vadd.f32 0.0, %v702
  %v704 = vpop.f32.mrf.mxu0
  %705 = vmatprep.mubr.f32.mxu0 0.0
  %706 = vmatmul.mubr.f32.gmra.mxu0 %v145
  %v707 = vpop.f32.mrf.mxu0
  %v708 = vadd.f32 0.0, %v707
  %v709 = vpop.f32.mrf.mxu0
  %710 = vmatprep.mubr.f32.mxu0 0.0
  %711 = vmatmul.mubr.f32.gmra.mxu0 %v148
  %v712 = vpop.f32.mrf.mxu0
  %v713 = vadd.f32 0.0, %v712
  %v714 = vpop.f32.mrf.mxu0
  %715 = vmatprep.mubr.f32.mxu0 0.0
  %716 = vmatmul.mubr.f32.gmra.mxu0 %v151
  %v717 = vpop.f32.mrf.mxu0
  %v718 = vadd.f32 0.0, %v717
  %v719 = vpop.f32.mrf.mxu0
  %720 = vmatprep.mubr.f32.mxu0 0.0
  %721 = vmatmul.mubr.f32.gmra.mxu0 %v154
  %v722 = vpop.f32.mrf.mxu0
  %v723 = vadd.f32 0.0, %v722
  %v724 = vpop.f32.mrf.mxu0
  %725 = vmatprep.mubr.f32.mxu0 0.0
  %726 = vmatmul.mubr.f32.gmra.mxu0 %v546
  %v727 = vpop.f32.mrf.mxu0
  %v728 = vadd.f32 0.0, %v727
  %v729 = vpop.f32.mrf.mxu0
  %730 = vmatprep.mubr.f32.mxu0 0.0
  %731 = vmatmul.mubr.f32.gmra.mxu0 %v549
  %v732 = vpop.f32.mrf.mxu0
  %v733 = vadd.f32 0.0, %v732
  %v734 = vpop.f32.mrf.mxu0
  %735 = vdwg.mxu0
  %v736 = vadd.f32 %v420, %v618
  %v737 = vadd.f32 %v425, %v623
  %v738 = vadd.f32 %v430, %v628
  %v739 = vadd.f32 %v435, %v633
  %v740 = vadd.f32 %v440, %v638
  %v741 = vadd.f32 %v445, %v643
  %v742 = vadd.f32 %v450, %v648
  %v743 = vadd.f32 %v455, %v653
  %v744 = vadd.f32 %v460, %v658
  %v745 = vadd.f32 %v465, %v663
  %v746 = vadd.f32 %v470, %v668
  %v747 = vadd.f32 %v475, %v673
  %v748 = vadd.f32 %v480, %v678
  %v749 = vadd.f32 %v485, %v683
  %v750 = vadd.f32 %v490, %v688
  %v751 = vadd.f32 %v495, %v693
  %v752 = vadd.f32 %v500, %v698
  %v753 = vadd.f32 %v505, %v703
  %v754 = vadd.f32 %v510, %v708
  %v755 = vadd.f32 %v515, %v713
  %v756 = vadd.f32 %v520, %v718
  %v757 = vadd.f32 %v525, %v723
  %v758 = vadd.f32 %v530, %v728
  %v759 = vadd.f32 %v535, %v733
  %v761 = vlaneseq
  %v762 = vshrl.u32 %v761, 7
  %v763 = vsub.s32 0, %v762
  %v764 = vrot.slane %v80, %v763
  %v766 = vadd.f32 %v736, %v764
  %v767 = vadd.f32 %v737, %v764
  %v768 = vadd.f32 %v738, %v764
  %v769 = vadd.f32 %v739, %v764
  %v770 = vadd.f32 %v740, %v764
  %v771 = vadd.f32 %v741, %v764
  %v772 = vadd.f32 %v742, %v764
  %v773 = vadd.f32 %v743, %v764
  %v774 = vadd.f32 %v744, %v764
  %v775 = vadd.f32 %v745, %v764
  %v776 = vadd.f32 %v746, %v764
  %v777 = vadd.f32 %v747, %v764
  %v778 = vadd.f32 %v748, %v764
  %v779 = vadd.f32 %v749, %v764
  %v780 = vadd.f32 %v750, %v764
  %v781 = vadd.f32 %v751, %v764
  %v782 = vadd.f32 %v752, %v764
  %v783 = vadd.f32 %v753, %v764
  %v784 = vadd.f32 %v754, %v764
  %v785 = vadd.f32 %v755, %v764
  %v786 = vadd.f32 %v756, %v764
  %v787 = vadd.f32 %v757, %v764
  %v788 = vadd.f32 %v758, %v764
  %v789 = vadd.f32 %v759, %v764
  %v790 = vxor.u32 %v766, 2147483648
  %v791 = vxor.u32 %v767, 2147483648
  %v792 = vxor.u32 %v768, 2147483648
  %v793 = vxor.u32 %v769, 2147483648
  %v794 = vxor.u32 %v770, 2147483648
  %v795 = vxor.u32 %v771, 2147483648
  %v796 = vxor.u32 %v772, 2147483648
  %v797 = vxor.u32 %v773, 2147483648
  %v798 = vxor.u32 %v774, 2147483648
  %v799 = vxor.u32 %v775, 2147483648
  %v800 = vxor.u32 %v776, 2147483648
  %v801 = vxor.u32 %v777, 2147483648
  %v802 = vxor.u32 %v778, 2147483648
  %v803 = vxor.u32 %v779, 2147483648
  %v804 = vxor.u32 %v780, 2147483648
  %v805 = vxor.u32 %v781, 2147483648
  %v806 = vxor.u32 %v782, 2147483648
  %v807 = vxor.u32 %v783, 2147483648
  %v808 = vxor.u32 %v784, 2147483648
  %v809 = vxor.u32 %v785, 2147483648
  %v810 = vxor.u32 %v786, 2147483648
  %v811 = vxor.u32 %v787, 2147483648
  %v812 = vxor.u32 %v788, 2147483648
  %v813 = vxor.u32 %v789, 2147483648
  %v814 = vmul.f32 %v790, 1.442695
  %v815 = vpow.pop %v814
  %v816 = vmul.f32 %v791, 1.442695
  %v817 = vpow.pop %v816
  %v818 = vmul.f32 %v792, 1.442695
  %v819 = vpow.pop %v818
  %v820 = vmul.f32 %v793, 1.442695
  %v821 = vpow.pop %v820
  %v822 = vmul.f32 %v794, 1.442695
  %v823 = vpow.pop %v822
  %v824 = vmul.f32 %v795, 1.442695
  %v825 = vpow.pop %v824
  %v826 = vmul.f32 %v796, 1.442695
  %v827 = vpow.pop %v826
  %v828 = vmul.f32 %v797, 1.442695
  %v829 = vpow.pop %v828
  %v830 = vmul.f32 %v798, 1.442695
  %v831 = vpow.pop %v830
  %v832 = vmul.f32 %v799, 1.442695
  %v833 = vpow.pop %v832
  %v834 = vmul.f32 %v800, 1.442695
  %v835 = vpow.pop %v834
  %v836 = vmul.f32 %v801, 1.442695
  %v837 = vpow.pop %v836
  %v838 = vmul.f32 %v802, 1.442695
  %v839 = vpow.pop %v838
  %v840 = vmul.f32 %v803, 1.442695
  %v841 = vpow.pop %v840
  %v842 = vmul.f32 %v804, 1.442695
  %v843 = vpow.pop %v842
  %v844 = vmul.f32 %v805, 1.442695
  %v845 = vpow.pop %v844
  %v846 = vmul.f32 %v806, 1.442695
  %v847 = vpow.pop %v846
  %v848 = vmul.f32 %v807, 1.442695
  %v849 = vpow.pop %v848
  %v850 = vmul.f32 %v808, 1.442695
  %v851 = vpow.pop %v850
  %v852 = vmul.f32 %v809, 1.442695
  %v853 = vpow.pop %v852
  %v854 = vmul.f32 %v810, 1.442695
  %v855 = vpow.pop %v854
  %v856 = vmul.f32 %v811, 1.442695
  %v857 = vpow.pop %v856
  %v858 = vmul.f32 %v812, 1.442695
  %v859 = vpow.pop %v858
  %v860 = vmul.f32 %v813, 1.442695
  %v861 = vpow.pop %v860
  %v862 = vadd.f32 %v815, 1.0
  %v863 = vadd.f32 %v817, 1.0
  %v864 = vadd.f32 %v819, 1.0
  %v865 = vadd.f32 %v821, 1.0
  %v866 = vadd.f32 %v823, 1.0
  %v867 = vadd.f32 %v825, 1.0
  %v868 = vadd.f32 %v827, 1.0
  %v869 = vadd.f32 %v829, 1.0
  %v870 = vadd.f32 %v831, 1.0
  %v871 = vadd.f32 %v833, 1.0
  %v872 = vadd.f32 %v835, 1.0
  %v873 = vadd.f32 %v837, 1.0
  %v874 = vadd.f32 %v839, 1.0
  %v875 = vadd.f32 %v841, 1.0
  %v876 = vadd.f32 %v843, 1.0
  %v877 = vadd.f32 %v845, 1.0
  %v878 = vadd.f32 %v847, 1.0
  %v879 = vadd.f32 %v849, 1.0
  %v880 = vadd.f32 %v851, 1.0
  %v881 = vadd.f32 %v853, 1.0
  %v882 = vadd.f32 %v855, 1.0
  %v883 = vadd.f32 %v857, 1.0
  %v884 = vadd.f32 %v859, 1.0
  %v885 = vadd.f32 %v861, 1.0
  %v886 = vrcp.pop %v862
  %v887 = vmul.f32 1.0, %v886
  %v888 = vrcp.pop %v863
  %v889 = vmul.f32 1.0, %v888
  %v890 = vrcp.pop %v864
  %v891 = vmul.f32 1.0, %v890
  %v892 = vrcp.pop %v865
  %v893 = vmul.f32 1.0, %v892
  %v894 = vrcp.pop %v866
  %v895 = vmul.f32 1.0, %v894
  %v896 = vrcp.pop %v867
  %v897 = vmul.f32 1.0, %v896
  %v898 = vrcp.pop %v868
  %v899 = vmul.f32 1.0, %v898
  %v900 = vrcp.pop %v869
  %v901 = vmul.f32 1.0, %v900
  %v902 = vrcp.pop %v870
  %v903 = vmul.f32 1.0, %v902
  %v904 = vrcp.pop %v871
  %v905 = vmul.f32 1.0, %v904
  %v906 = vrcp.pop %v872
  %v907 = vmul.f32 1.0, %v906
  %v908 = vrcp.pop %v873
  %v909 = vmul.f32 1.0, %v908
  %v910 = vrcp.pop %v874
  %v911 = vmul.f32 1.0, %v910
  %v912 = vrcp.pop %v875
  %v913 = vmul.f32 1.0, %v912
  %v914 = vrcp.pop %v876
  %v915 = vmul.f32 1.0, %v914
  %v916 = vrcp.pop %v877
  %v917 = vmul.f32 1.0, %v916
  %v918 = vrcp.pop %v878
  %v919 = vmul.f32 1.0, %v918
  %v920 = vrcp.pop %v879
  %v921 = vmul.f32 1.0, %v920
  %v922 = vrcp.pop %v880
  %v923 = vmul.f32 1.0, %v922
  %v924 = vrcp.pop %v881
  %v925 = vmul.f32 1.0, %v924
  %v926 = vrcp.pop %v882
  %v927 = vmul.f32 1.0, %v926
  %v928 = vrcp.pop %v883
  %v929 = vmul.f32 1.0, %v928
  %v930 = vrcp.pop %v884
  %v931 = vmul.f32 1.0, %v930
  %v932 = vrcp.pop %v885
  %v933 = vmul.f32 1.0, %v932
  %958 = vrot.lane.b32.xlu0 %v887, 124
  %v959 = vpop.permute.xlu0 %958
  %960 = vrot.lane.b32.xlu0 %v889, 124
  %v961 = vpop.permute.xlu0 %960
  %962 = vrot.lane.b32.xlu0 %v891, 124
  %v963 = vpop.permute.xlu0 %962
  %964 = vrot.lane.b32.xlu0 %v893, 124
  %v965 = vpop.permute.xlu0 %964
  %966 = vrot.lane.b32.xlu0 %v895, 124
  %v967 = vpop.permute.xlu0 %966
  %968 = vrot.lane.b32.xlu0 %v897, 124
  %v969 = vpop.permute.xlu0 %968
  %970 = vrot.lane.b32.xlu0 %v899, 124
  %v971 = vpop.permute.xlu0 %970
  %972 = vrot.lane.b32.xlu0 %v901, 124
  %v973 = vpop.permute.xlu0 %972
  %974 = vrot.lane.b32.xlu0 %v903, 124
  %v975 = vpop.permute.xlu0 %974
  %976 = vrot.lane.b32.xlu0 %v905, 124
  %v977 = vpop.permute.xlu0 %976
  %978 = vrot.lane.b32.xlu0 %v907, 124
  %v979 = vpop.permute.xlu0 %978
  %980 = vrot.lane.b32.xlu0 %v909, 124
  %v981 = vpop.permute.xlu0 %980
  %982 = vrot.lane.b32.xlu0 %v911, 124
  %v983 = vpop.permute.xlu0 %982
  %984 = vrot.lane.b32.xlu0 %v913, 124
  %v985 = vpop.permute.xlu0 %984
  %986 = vrot.lane.b32.xlu0 %v915, 124
  %v987 = vpop.permute.xlu0 %986
  %988 = vrot.lane.b32.xlu0 %v917, 124
  %v989 = vpop.permute.xlu0 %988
  %990 = vrot.lane.b32.xlu0 %v919, 124
  %v991 = vpop.permute.xlu0 %990
  %992 = vrot.lane.b32.xlu0 %v921, 124
  %v993 = vpop.permute.xlu0 %992
  %994 = vrot.lane.b32.xlu0 %v923, 124
  %v995 = vpop.permute.xlu0 %994
  %996 = vrot.lane.b32.xlu0 %v925, 124
  %v997 = vpop.permute.xlu0 %996
  %998 = vrot.lane.b32.xlu0 %v927, 124
  %v999 = vpop.permute.xlu0 %998
  %1000 = vrot.lane.b32.xlu0 %v929, 124
  %v1001 = vpop.permute.xlu0 %1000
  %1002 = vrot.lane.b32.xlu0 %v931, 124
  %v1003 = vpop.permute.xlu0 %1002
  %1004 = vrot.lane.b32.xlu0 %v933, 124
  %v1005 = vpop.permute.xlu0 %1004
  %v1030 = vmul.f32 %v766, %v959
  %v1031 = vmul.f32 %v767, %v961
  %v1032 = vmul.f32 %v768, %v963
  %v1033 = vmul.f32 %v769, %v965
  %v1034 = vmul.f32 %v770, %v967
  %v1035 = vmul.f32 %v771, %v969
  %v1036 = vmul.f32 %v772, %v971
  %v1037 = vmul.f32 %v773, %v973
  %v1038 = vmul.f32 %v774, %v975
  %v1039 = vmul.f32 %v775, %v977
  %v1040 = vmul.f32 %v776, %v979
  %v1041 = vmul.f32 %v777, %v981
  %v1042 = vmul.f32 %v778, %v983
  %v1043 = vmul.f32 %v779, %v985
  %v1044 = vmul.f32 %v780, %v987
  %v1045 = vmul.f32 %v781, %v989
  %v1046 = vmul.f32 %v782, %v991
  %v1047 = vmul.f32 %v783, %v993
  %v1048 = vmul.f32 %v784, %v995
  %v1049 = vmul.f32 %v785, %v997
  %v1050 = vmul.f32 %v786, %v999
  %v1051 = vmul.f32 %v787, %v1001
  %v1052 = vmul.f32 %v788, %v1003
  %v1053 = vmul.f32 %v789, %v1005
  %1054 = vxpose.xlu0.b32.start [1/16] %v1030, 128
  %1055 = vxpose.xlu0.b32.cont [2/16] %v1031, 128
  %1056 = vxpose.xlu0.b32.cont [3/16] %v1032, 128
  %1057 = vxpose.xlu0.b32.cont [4/16] %v1033, 128
  %1058 = vxpose.xlu0.b32.cont [5/16] %v1034, 128
  %1059 = vxpose.xlu0.b32.cont [6/16] %v1035, 128
  %1060 = vxpose.xlu0.b32.cont [7/16] %v1036, 128
  %1061 = vxpose.xlu0.b32.cont [8/16] %v1037, 128
  %1062 = vxpose.xlu0.b32.cont [9/16] %v1038, 128
  %1063 = vxpose.xlu0.b32.cont [10/16] %v1039, 128
  %1064 = vxpose.xlu0.b32.cont [11/16] %v1040, 128
  %1065 = vxpose.xlu0.b32.cont [12/16] %v1041, 128
  %1066 = vxpose.xlu0.b32.cont [13/16] 0.0, 128
  %1067 = vxpose.xlu0.b32.cont [14/16] 0.0, 128
  %1068 = vxpose.xlu0.b32.cont [15/16] 0.0, 128
  %1069 = vxpose.xlu0.b32.end [16/16] 0.0, 128
  %v1070 = vpop.trf.xlu0
  %v1071 = vpop.trf.xlu0
  %v1072 = vpop.trf.xlu0
  %v1073 = vpop.trf.xlu0
  %v1074 = vpop.trf.xlu0
  %v1075 = vpop.trf.xlu0
  %v1076 = vpop.trf.xlu0
  %v1077 = vpop.trf.xlu0
  %v1078 = vpop.trf.xlu0
  %v1079 = vpop.trf.xlu0
  %v1080 = vpop.trf.xlu0
  %v1081 = vpop.trf.xlu0
  %v1082 = vpop.trf.xlu0
  %v1083 = vpop.trf.xlu0
  %v1084 = vpop.trf.xlu0
  %v1085 = vpop.trf.xlu0
  %1086 = vxpose.xlu0.b32.start [1/16] %v1042, 128
  %1087 = vxpose.xlu0.b32.cont [2/16] %v1043, 128
  %1088 = vxpose.xlu0.b32.cont [3/16] %v1044, 128
  %1089 = vxpose.xlu0.b32.cont [4/16] %v1045, 128
  %1090 = vxpose.xlu0.b32.cont [5/16] %v1046, 128
  %1091 = vxpose.xlu0.b32.cont [6/16] %v1047, 128
  %1092 = vxpose.xlu0.b32.cont [7/16] %v1048, 128
  %1093 = vxpose.xlu0.b32.cont [8/16] %v1049, 128
  %1094 = vxpose.xlu0.b32.cont [9/16] %v1050, 128
  %1095 = vxpose.xlu0.b32.cont [10/16] %v1051, 128
  %1096 = vxpose.xlu0.b32.cont [11/16] %v1052, 128
  %1097 = vxpose.xlu0.b32.cont [12/16] %v1053, 128
  %1098 = vxpose.xlu0.b32.cont [13/16] 0.0, 128
  %1099 = vxpose.xlu0.b32.cont [14/16] 0.0, 128
  %1100 = vxpose.xlu0.b32.cont [15/16] 0.0, 128
  %1101 = vxpose.xlu0.b32.end [16/16] 0.0, 128
  %v1102 = vpop.trf.xlu0
  %v1103 = vpop.trf.xlu0
  %v1104 = vpop.trf.xlu0
  %v1105 = vpop.trf.xlu0
  %v1106 = vpop.trf.xlu0
  %v1107 = vpop.trf.xlu0
  %v1108 = vpop.trf.xlu0
  %v1109 = vpop.trf.xlu0
  %v1110 = vpop.trf.xlu0
  %v1111 = vpop.trf.xlu0
  %v1112 = vpop.trf.xlu0
  %v1113 = vpop.trf.xlu0
  %v1114 = vpop.trf.xlu0
  %v1115 = vpop.trf.xlu0
  %v1116 = vpop.trf.xlu0
  %v1117 = vpop.trf.xlu0
  %vm1118 = vcmask 781312
  %1119 = vst.msk [vmem:[%s3] sm:$0xf] %vm1118, %v1070
  %1120 = vst.msk [vmem:[%s3 + $0x4] sm:$0xf] %vm1118, %v1102
  // Predicated region
  $region14: #{temporal_conv_layer.1} parent=0 // pred_check
    _
  $region15: #{temporal_conv_layer.1} parent=0 // pred_check_branch
    %1122 = sbr.rel (0) target = $region17
  $region16: #{temporal_conv_layer.1} parent=0 // pred_region
    _
  $region17: #{temporal_conv_layer.1} parent=0 // pred_fallthru
    _
  // Predicated region
  $region18: #{temporal_conv_layer.1} parent=0 // pred_check
    _
  $region19: #{temporal_conv_layer.1} parent=0 // pred_check_branch
    %1124 = sbr.rel (0) target = $region21
  $region20: #{temporal_conv_layer.1} parent=0 // pred_region
    _
  $region21: #{temporal_conv_layer.1} parent=0 // pred_fallthru
    _

</llo_original>
